<compile_context>
chip_gen: v5e
topology: v5e:2x2
jax: 0.10.0
libtpu: 0.0.40
codegen_flags: <defaults>
</compile_context>

<pallas_src>
import functools

import jax
import jax.numpy as jnp
import numpy as np
from jax.experimental import pallas as pl
from jax.experimental.pallas import tpu as pltpu


def _pool_kernel(n_hidden, S, TS, use_mxu, s_ragged, mask_ref, *refs):
    """Masked mean over the sequence axis.

    refs = (*hidden_refs, out_ref, num_acc, den_acc).
    Grid = (batch tiles, hidden tiles, sequence tiles); sequence is the innermost
    reduction axis, accumulated in f32 VMEM scratch.
    """
    hidden_refs = refs[:n_hidden]
    out_ref = refs[n_hidden]
    num_acc = refs[n_hidden + 1]
    den_acc = refs[n_hidden + 2]

    k = pl.program_id(2)

    @pl.when(k == 0)
    def _():
        num_acc[...] = jnp.zeros_like(num_acc)
        den_acc[...] = jnp.zeros_like(den_acc)

    mask = mask_ref[...]  # (TB, TS) float32

    if s_ragged:
        # cdiv grid along S: the last tile reads past S and those values are
        # undefined, so zero both the mask and the hidden data explicitly
        # (a zeroed mask alone would not neutralize NaN garbage in the hidden).
        pos = jax.lax.broadcasted_iota(jnp.int32, (1, TS), 1) + k * TS
        mask = jnp.where(pos < S, mask, 0.0)
        valid_h = (pos < S)[:, :, None]  # (1, TS, 1)

    # Denominator: sum of the mask over the sequence axis (tail positions are 0).
    den_acc[...] += jnp.sum(mask, axis=1, keepdims=True)  # (TB, 1)

    h_dtype = hidden_refs[0].dtype
    if use_mxu:
        mask_mm = mask.astype(h_dtype)[:, None, :]  # (TB, 1, TS), hoisted once
    else:
        mask_b = mask[:, :, None]                   # (TB, TS, 1), hoisted once

    for h_ref in hidden_refs:
        h = h_ref[...]  # (TB, TS, TH), native dtype (no full-tile f32 upcast)
        if s_ragged:
            h = jnp.where(valid_h, h, jnp.zeros((), h.dtype))
        if use_mxu:
            # Sub-32-bit hiddens: batched (1, TS) @ (TS, TH) matvec on the MXU,
            # f32 accumulation (exact for a 0/1 mask).  Keeps the VPU free.
            part = jnp.einsum(
                "bqs,bsh->bqh", mask_mm, h,
                preferred_element_type=jnp.float32)  # (TB, 1, TH)
            num_acc[...] += part[:, 0, :]
        else:
            # f32 hiddens: 2 VPU ops / element -> HBM-bound on every generation.
            num_acc[...] += jnp.sum(h * mask_b, axis=1)

    @pl.when(k == pl.num_programs(2) - 1)
    def _():
        # Fold the /n_hidden of (h0 + h1)/2 into the per-row normalization.
        # Rows with an all-zero mask divide by zero (matches the torch reference).
        inv = pl.reciprocal(float(n_hidden) * den_acc[...], approx=False)  # (TB, 1)
        out_ref[...] = (num_acc[...] * inv).astype(out_ref.dtype)


def _choose_tiles(B, S, H, h_itemsize, n_hidden, vmem_cap, max_ts=None):
    # Batch tile: dtype-aware sublane packing of the (TB, TH) output block
    # (8 rows f32 / 16 bf16 / 32 fp8-int8).  TB == B (full dim) for small
    # batches, otherwise a packed multiple with a cdiv tail block.
    tb_pref = {4: 8, 2: 16, 1: 32}.get(h_itemsize, 8)
    TB = tb_pref if B >= tb_pref else B

    # Per-generation budget for the double-buffered hidden blocks: <= 3/8 of
    # physical VMEM (24 MiB on v7x's 64 MiB), capped at 32 MiB on v5e/v6e's
    # 128 MiB, so est * 1.5 stays well clear of capacity.
    hidden_budget = min(32 * 1024 * 1024, (3 * vmem_cap) // 8)

    def hidden_bytes(ts, th):
        return n_hidden * 2 * TB * ts * th * h_itemsize

    min_ts = S if S <= 128 else 128
    th_divs = [d for d in range(128, H + 1, 128) if H % d == 0]

    # Hidden tile along H: full H unless (a) even TS=128 blows the VMEM budget,
    # or (b) there is only one batch tile, in which case splitting H gives the
    # second TensorCore (v7x megacore) parallel work.
    TH = H
    if th_divs:
        if hidden_bytes(min_ts, TH) > hidden_budget:
            fitting = [d for d in th_divs if hidden_bytes(min_ts, d) <= hidden_budget]
            TH = max(fitting) if fitting else th_divs[0]
        if pl.cdiv(B, TB) == 1:
            halves = [d for d in th_divs if d <= TH // 2]
            if halves:
                TH = max(halves)

    # Last resort for huge H that cannot be lane-tiled (H not a multiple of 128):
    # shrink the batch tile (stays a multiple of 8).
    while TB > 8 and hidden_bytes(min_ts, TH) > hidden_budget:
        TB //= 2

    # Sequence tile (reduction axis): a single full-S tile when it fits the
    # budget, otherwise the largest 128-multiple that does (cdiv grid +
    # in-kernel tail zeroing handles ragged S).
    if S <= 128:
        TS = S
    else:
        cap = max(128, (hidden_budget // max(hidden_bytes(1, TH), 1)) // 128 * 128)
        TS = S if cap >= S else cap
    if max_ts is not None and S > max_ts:
        TS = min(TS, max_ts)  # test hook: force a multi-step reduction

    return TB, TS, TH


def _vmem_limit_bytes(n_hidden, TB, TS, TH, h_itemsize, vmem_cap):
    est = (
        n_hidden * 2 * TB * TS * TH * h_itemsize   # double-buffered hidden blocks
        + 2 * TB * max(TS, 128) * 4                # double-buffered f32 mask block
        + 2 * TB * TH * h_itemsize                 # double-buffered output block
        + TB * TH * 4                              # f32 numerator accumulator
        + 8 * 128 * 4                              # f32 denominator (padded tile)
    )
    est += est // 2                                # headroom for compiler temporaries
    floor = 16 * 1024 * 1024
    return int(min(max(est, floor), max(vmem_cap - (2 << 20), floor)))


def _masked_mean_pallas(attention_mask, hiddens, max_ts=None):
    """attention_mask: [B, S] (any int/bool/float dtype); hiddens: 1 or 2 arrays
    of shape [B, S, H].  Returns sum_s(mean(hiddens) * mask) / sum_s(mask) -> [B, H]."""
    n_hidden = len(hiddens)
    assert n_hidden in (1, 2)
    B, S, H = hiddens[0].shape
    out_dtype = hiddens[0].dtype
    h_itemsize = jnp.dtype(out_dtype).itemsize

    try:
        vmem_cap = int(pltpu.get_tpu_info().vmem_capacity_bytes)
    except Exception:
        vmem_cap = 64 * 1024 * 1024  # conservative default (v7x per-TC VMEM)

    TB, TS, TH = _choose_tiles(B, S, H, h_itemsize, n_hidden, vmem_cap, max_ts=max_ts)
    nb, nh, nk = pl.cdiv(B, TB), H // TH, pl.cdiv(S, TS)
    s_ragged = (S % TS) != 0
    use_mxu = h_itemsize < 4  # bf16 / fp16 / fp8 -> MXU matvec path

    # The mask is tiny ([B, S]); make it f32 up front so its (TB, TS) block never
    # hits packed-sublane tiling restrictions for bool/int8 masks.
    mask = attention_mask.astype(jnp.float32)

    kernel = functools.partial(_pool_kernel, n_hidden, S, TS, use_mxu, s_ragged)

    mask_spec = pl.BlockSpec((TB, TS), lambda b, h, k: (b, k))
    # (pipeline_mode=pl.Buffered(3) on h_spec is a possible v7x sweep if xprof
    #  shows exposed DMA waits; left at the default double-buffering here.)
    h_spec = pl.BlockSpec((TB, TS, TH), lambda b, h, k: (b, k, h))
    out_spec = pl.BlockSpec((TB, TH), lambda b, h, k: (b, h))

    return pl.pallas_call(
        kernel,
        out_shape=jax.ShapeDtypeStruct((B, H), out_dtype),
        grid_spec=pltpu.PrefetchScalarGridSpec(
            num_scalar_prefetch=0,
            grid=(nb, nh, nk),
            in_specs=[mask_spec] + [h_spec] * n_hidden,
            out_specs=out_spec,
            scratch_shapes=[
                pltpu.VMEM((TB, TH), jnp.float32),  # numerator accumulator
                pltpu.VMEM((TB, 1), jnp.float32),   # denominator accumulator
            ],
        ),
        compiler_params=pltpu.CompilerParams(
            dimension_semantics=("parallel", "parallel", "arbitrary"),
            vmem_limit_bytes=_vmem_limit_bytes(
                n_hidden, TB, TS, TH, h_itemsize, vmem_cap),
        ),
    )(mask, *hiddens)


class Pooler:
    """JAX/Pallas port of the parameter-free SimCSE Pooler
    ('avg', 'avg_top2', 'avg_first_last')."""

    def __init__(self, pooler_type):
        assert pooler_type in ["avg", "avg_top2", "avg_first_last"], (
            "unrecognized pooling type %s" % pooler_type)
        self.pooler_type = pooler_type

    def __call__(self, attention_mask, outputs):
        if isinstance(outputs, dict):
            last_hidden = outputs["last_hidden_state"]
            hidden_states = outputs["hidden_states"]
        else:
            last_hidden = outputs.last_hidden_state
            hidden_states = outputs.hidden_states
        if self.pooler_type == "avg":
            hiddens = (last_hidden,)  # single-input kernel: half the HBM traffic
        elif self.pooler_type == "avg_first_last":
            hiddens = (hidden_states[0], hidden_states[-1])
        else:  # 'avg_top2'
            hiddens = (hidden_states[-2], hidden_states[-1])
        return _masked_mean_pallas(attention_mask, hiddens)


def _reference(attention_mask, hiddens):
    m = attention_mask.astype(jnp.float32)[..., None]  # [B, S, 1]
    h = sum(h_.astype(jnp.float32) for h_ in hiddens) / float(len(hiddens))
    return (h * m).sum(1) / m.sum(1)


if __name__ == "__main__":
    root = jax.random.PRNGKey(0)
    k_case1, k_case2, k_case3 = jax.random.split(root, 3)
    ok = True

    # --- Case 1: small f32 shapes (VPU path), all three pooler types ----------
    B, S, H, n_layers = 2, 8, 32, 3
    hkeys = jax.random.split(k_case1, n_layers)
    hidden_states = tuple(
        jax.random.normal(hkeys[i], (B, S, H), dtype=jnp.float32)
        for i in range(n_layers))
    outputs = {"last_hidden_state": hidden_states[-1],
               "hidden_states": hidden_states}
    mask = jnp.array([[1] * S, [1] * (S // 2) + [0] * (S - S // 2)],
                     dtype=jnp.int32)

    for ptype in ["avg", "avg_first_last", "avg_top2"]:
        got = jax.block_until_ready(Pooler(ptype)(mask, outputs))
        if ptype == "avg":
            hs = (hidden_states[-1],)
        elif ptype == "avg_first_last":
            hs = (hidden_states[0], hidden_states[-1])
        else:
            hs = (hidden_states[-2], hidden_states[-1])
        want = _reference(mask, hs)
        ok &= bool(np.allclose(np.asarray(got, dtype=np.float32),
                               np.asarray(want), rtol=1e-5, atol=1e-5))

    # --- Case 2: bf16 hiddens, ragged S, forced multi-step reduction ----------
    # (exercises the MXU matvec path, sequence-tail zeroing and the H-tile axis)
    B, S, H = 4, 300, 256
    k2a, k2b = jax.random.split(k_case2)
    h0 = jax.random.normal(k2a, (B, S, H), dtype=jnp.bfloat16)
    h1 = jax.random.normal(k2b, (B, S, H), dtype=jnp.bfloat16)
    lens2 = jnp.array([300, 257, 128, 1], dtype=jnp.int32)
    mask2 = (jnp.arange(S)[None, :] < lens2[:, None]).astype(jnp.int32)
    got2 = jax.block_until_ready(_masked_mean_pallas(mask2, (h0, h1), max_ts=128))
    want2 = _reference(mask2, (h0, h1))
    ok &= bool(np.allclose(np.asarray(got2, dtype=np.float32),
                           np.asarray(want2), rtol=2e-2, atol=2e-2))

    # --- Case 3: f32, ragged batch (B=10 -> TB=8 + tail block) ----------------
    h3 = jax.random.normal(k_case3, (10, 136, 32), dtype=jnp.float32)
    lens3 = jnp.array([136, 136, 136, 136, 136, 20, 40, 60, 80, 100],
                      dtype=jnp.int32)
    mask3 = (jnp.arange(136)[None, :] < lens3[:, None]).astype(jnp.float32)
    got3 = jax.block_until_ready(_masked_mean_pallas(mask3, (h3,)))
    want3 = _reference(mask3, (h3,))
    ok &= bool(np.allclose(np.asarray(got3), np.asarray(want3),
                           rtol=1e-5, atol=1e-5))

    if ok:
        print("KERNEL_OK")
</pallas_src>

<mosaic_0001>
module attributes {stable_mosaic.version = 11 : i64} {
  func.func @_pool_kernel(%arg0: i32, %arg1: i32, %arg2: i32, %arg3: memref<2x8xf32, #tpu.memory_space<vmem>>, %arg4: memref<2x8x32xf32, #tpu.memory_space<vmem>>, %arg5: memref<2x32xf32, #tpu.memory_space<vmem>>, %arg6: memref<2x32xf32, #tpu.memory_space<vmem>>, %arg7: memref<2x1xf32, #tpu.memory_space<vmem>>) attributes {dimension_semantics = [#tpu.dimension_semantics<parallel>, #tpu.dimension_semantics<parallel>, #tpu.dimension_semantics<arbitrary>], iteration_bounds = array<i64: 1, 1, 1>, scalar_prefetch = 0 : i64, scratch_operands = 2 : i64, tpu.core_type = #tpu.core_type<tc>, window_params = [{transform_indices = @transform_0, window_bounds = array<i64: 2, 8>}, {transform_indices = @transform_1, window_bounds = array<i64: 2, 8, 32>}, {transform_indices = @transform_2, window_bounds = array<i64: 2, 32>}]} {
    %c0_i32 = arith.constant 0 : i32
    %0 = arith.cmpi eq, %arg2, %c0_i32 : i32
    %1 = arith.extui %0 : i1 to i32
    %c0_i32_0 = arith.constant 0 : i32
    %2 = arith.cmpi ne, %1, %c0_i32_0 : i32
    scf.if %2 {
      %cst_16 = arith.constant 0.000000e+00 : f32
      %20 = vector.broadcast %cst_16 : f32 to vector<2x32xf32>
      %c0_17 = arith.constant 0 : index
      %c0_18 = arith.constant 0 : index
      %21 = vector.load %arg6[%c0_17, %c0_18] : memref<2x32xf32, #tpu.memory_space<vmem>>, vector<2x32xf32>
      tpu.vector_store %arg6[%c0_17, %c0_18], %20 {strides = array<i32>} : memref<2x32xf32, #tpu.memory_space<vmem>>, vector<2x32xf32>,
      %cst_19 = arith.constant 0.000000e+00 : f32
      %22 = vector.broadcast %cst_19 : f32 to vector<2x1xf32>
      %c0_20 = arith.constant 0 : index
      %c0_21 = arith.constant 0 : index
      %23 = vector.load %arg7[%c0_20, %c0_21] : memref<2x1xf32, #tpu.memory_space<vmem>>, vector<2x1xf32>
      tpu.vector_store %arg7[%c0_20, %c0_21], %22 {strides = array<i32>} : memref<2x1xf32, #tpu.memory_space<vmem>>, vector<2x1xf32>,
    } else {
    }
    %c0 = arith.constant 0 : index
    %c0_1 = arith.constant 0 : index
    %3 = vector.load %arg3[%c0, %c0_1] : memref<2x8xf32, #tpu.memory_space<vmem>>, vector<2x8xf32>
    %c0_2 = arith.constant 0 : index
    %c0_3 = arith.constant 0 : index
    %4 = vector.load %arg7[%c0_2, %c0_3] : memref<2x1xf32, #tpu.memory_space<vmem>>, vector<2x1xf32>
    %cst = arith.constant dense<0.000000e+00> : vector<2xf32>
    %5 = vector.multi_reduction <add>, %3, %cst [1] : vector<2x8xf32> to vector<2xf32>
    %6 = vector.shape_cast %5 : vector<2xf32> to vector<2x1xf32>
    %7 = arith.addf %4, %6 : vector<2x1xf32>
    %c0_4 = arith.constant 0 : index
    %c0_5 = arith.constant 0 : index
    %8 = vector.load %arg7[%c0_4, %c0_5] : memref<2x1xf32, #tpu.memory_space<vmem>>, vector<2x1xf32>
    tpu.vector_store %arg7[%c0_4, %c0_5], %7 {strides = array<i32>} : memref<2x1xf32, #tpu.memory_space<vmem>>, vector<2x1xf32>,
    %9 = vector.shape_cast %3 : vector<2x8xf32> to vector<2x8x1xf32>
    %c0_6 = arith.constant 0 : index
    %c0_7 = arith.constant 0 : index
    %c0_8 = arith.constant 0 : index
    %10 = vector.load %arg4[%c0_6, %c0_7, %c0_8] : memref<2x8x32xf32, #tpu.memory_space<vmem>>, vector<2x8x32xf32>
    %c0_9 = arith.constant 0 : index
    %c0_10 = arith.constant 0 : index
    %11 = vector.load %arg6[%c0_9, %c0_10] : memref<2x32xf32, #tpu.memory_space<vmem>>, vector<2x32xf32>
    %12 = vector.broadcast %9 : vector<2x8x1xf32> to vector<2x8x32xf32>
    %13 = arith.mulf %10, %12 : vector<2x8x32xf32>
    %cst_11 = arith.constant dense<0.000000e+00> : vector<2x32xf32>
    %14 = vector.multi_reduction <add>, %13, %cst_11 [1] : vector<2x8x32xf32> to vector<2x32xf32>
    %15 = arith.addf %11, %14 : vector<2x32xf32>
    %c0_12 = arith.constant 0 : index
    %c0_13 = arith.constant 0 : index
    %16 = vector.load %arg6[%c0_12, %c0_13] : memref<2x32xf32, #tpu.memory_space<vmem>>, vector<2x32xf32>
    tpu.vector_store %arg6[%c0_12, %c0_13], %15 {strides = array<i32>} : memref<2x32xf32, #tpu.memory_space<vmem>>, vector<2x32xf32>,
    %c0_i32_14 = arith.constant 0 : i32
    %17 = arith.cmpi eq, %arg2, %c0_i32_14 : i32
    %18 = arith.extui %17 : i1 to i32
    %c0_i32_15 = arith.constant 0 : i32
    %19 = arith.cmpi ne, %18, %c0_i32_15 : i32
    scf.if %19 {
      %c0_16 = arith.constant 0 : index
      %c0_17 = arith.constant 0 : index
      %20 = vector.load %arg7[%c0_16, %c0_17] : memref<2x1xf32, #tpu.memory_space<vmem>>, vector<2x1xf32>
      %cst_18 = arith.constant 1.000000e+00 : f32
      %21 = vector.broadcast %cst_18 : f32 to vector<2x1xf32>
      %22 = arith.mulf %21, %20 : vector<2x1xf32>
      %23 = tpu.reciprocal %22 : vector<2x1xf32> -> vector<2x1xf32>
      %c0_19 = arith.constant 0 : index
      %c0_20 = arith.constant 0 : index
      %24 = vector.load %arg6[%c0_19, %c0_20] : memref<2x32xf32, #tpu.memory_space<vmem>>, vector<2x32xf32>
      %25 = vector.broadcast %23 : vector<2x1xf32> to vector<2x32xf32>
      %26 = arith.mulf %24, %25 : vector<2x32xf32>
      %c0_21 = arith.constant 0 : index
      %c0_22 = arith.constant 0 : index
      %27 = vector.load %arg5[%c0_21, %c0_22] : memref<2x32xf32, #tpu.memory_space<vmem>>, vector<2x32xf32>
      tpu.vector_store %arg5[%c0_21, %c0_22], %26 {strides = array<i32>} : memref<2x32xf32, #tpu.memory_space<vmem>>, vector<2x32xf32>,
    } else {
    }
    return
  }
  func.func @transform_0(%arg0: i32, %arg1: i32, %arg2: i32) -> (i32, i32) {
    %c0_i32 = arith.constant 0 : i32
    return %arg0, %arg2 : i32, i32
  }
  func.func @transform_1(%arg0: i32, %arg1: i32, %arg2: i32) -> (i32, i32, i32) {
    %c0_i32 = arith.constant 0 : i32
    return %arg0, %arg2, %arg1 : i32, i32, i32
  }
  func.func @transform_2(%arg0: i32, %arg1: i32, %arg2: i32) -> (i32, i32) {
    %c0_i32 = arith.constant 0 : i32
    return %arg0, %arg1 : i32, i32
  }
}

</mosaic_0001>

<llo_original>
// kernel: tpu_custom_call.1
$region0: #{tpu_custom_call.1}
  #allocation0 [shape = 'u32[]', space=smem, size = 0x4, offset = 0x4, fixed_abs, tag = 'smem constant byte address 0x4 - core index']
  #allocation1 [shape = 'u32[72,128]{1,0:T(1,128)}', space=vmem, size = 0x9000, scoped, tag = 'internal scratch']
  #allocation2 [shape = 'f32[2,32]{1,0:T(2,128)}', space=vmem, size = 0x400, scoped, tag = 'scratch operand']
  #allocation3 [shape = 'f32[2,1]{1,0:T(2,128)}', space=vmem, size = 0x400, scoped, tag = 'scratch operand']
  %s0 = inlined_call_operand.hbm [shape: f32[2,8], index: 0, kind: input, shape index: {}]
  %s1 = inlined_call_operand.hbm [shape: f32[2,8,32], index: 1, kind: input, shape index: {}]
  %s2 = inlined_call_operand.hbm [shape: f32[2,32], index: 2, kind: output, shape index: {}]
  %s3 = sld [smem:[#allocation0]]
  $region34: #{tpu_custom_call.1} parent=0
    _
  %s5 = ssub.s32 1, %s3
  %s6 = scalar_select 0, %s5, %s3
  $region1: #{tpu_custom_call.1} parent=0
    #allocation4 [shape = 'u8[1024]{0}', space=vmem, size = 0x400, scoped, tag = 'input window, operand 0, single buffered']
    #allocation5 [shape = 's32[1]{0}', space=sflag, size = 0x4, scoped, tag = 'scoped memory for tpu_custom_call.1']
    #allocation6 [shape = 's32[1]{0}', space=sflag, size = 0x4, scoped, tag = 'scoped memory for tpu_custom_call.1']
    #allocation7 [shape = 'u8[8192]{0}', space=vmem, size = 0x2000, scoped, tag = 'input window, operand 1, single buffered']
    #allocation8 [shape = 's32[1]{0}', space=sflag, size = 0x4, scoped, tag = 'scoped memory for tpu_custom_call.1']
    #allocation9 [shape = 'u8[1024]{0}', space=vmem, size = 0x400, scoped, tag = 'output window, operand 0, single buffered']
    %7 = vsyncpa [#allocation5], 0
    %8 = vsyncpa [#allocation8], 0
    %9 = vsyncpa [#allocation6], 0
    // Predicated region
    $region2: #{tpu_custom_call.1} parent=1 // pred_check
      _
    $region3: #{tpu_custom_call.1} parent=1 // pred_check_branch
      %11 = sbr.rel (0) target = $region5
    $region4: #{tpu_custom_call.1} parent=1 // pred_region
      %13 = vsyncadd [#allocation5], 0
      %s15 = sshll.u32 %s0, 4
      %s16 = int_to_ptr.hbm [resolvable:$true] %s15
      %s17 = sshll.u32 [#allocation4], 4
      %s18 = int_to_ptr.vmem [resolvable:$true] %s17
      %20 = dma.hbm_to_vmem [thread:$0]  %s16, 32, %s18, [#allocation5]
    $region5: #{tpu_custom_call.1} parent=1 // pred_fallthru
      _
    // Predicated region
    $region6: #{tpu_custom_call.1} parent=1 // pred_check
      _
    $region7: #{tpu_custom_call.1} parent=1 // pred_check_branch
      %22 = sbr.rel (0) target = $region9
    $region8: #{tpu_custom_call.1} parent=1 // pred_region
      %24 = vsyncadd [#allocation8], 0
      %s25 = sshll.u32 %s1, 4
      %s26 = int_to_ptr.hbm [resolvable:$true] %s25
      %s27 = sshll.u32 [#allocation7], 4
      %s28 = int_to_ptr.vmem [resolvable:$true] %s27
      %33 = dma.hbm_to_vmem [thread:$0]  %s26, 256, %s28, [#allocation8], 128, 128, 8
    $region9: #{tpu_custom_call.1} parent=1 // pred_fallthru
      _
    // Predicated region
    $region10: #{tpu_custom_call.1} parent=1 // pred_check
      _
    $region11: #{tpu_custom_call.1} parent=1 // pred_check_branch
      %35 = sbr.rel (0) target = $region13
    $region12: #{tpu_custom_call.1} parent=1 // pred_region
      %37 = dma.done [#allocation5], 32
    $region13: #{tpu_custom_call.1} parent=1 // pred_fallthru
      _
    // Predicated region
    $region14: #{tpu_custom_call.1} parent=1 // pred_check
      _
    $region15: #{tpu_custom_call.1} parent=1 // pred_check_branch
      %39 = sbr.rel (0) target = $region17
    $region16: #{tpu_custom_call.1} parent=1 // pred_region
      %41 = dma.done [#allocation8], 256
    $region17: #{tpu_custom_call.1} parent=1 // pred_fallthru
      _
    %p42 = scmp.eq.s32.totalorder 0, 0
    // Predicated region
    $region18: #{tpu_custom_call.1} parent=1 // pred_check
      %p43 = pneg %p42
    $region19: #{tpu_custom_call.1} parent=1 // pred_check_branch
      %45 = sbr.rel (%p43) target = $region21
    $region20: #{tpu_custom_call.1} parent=1 // pred_region
      %vm46 = vcmask 254976
      %47 = vst.msk [vmem:[#allocation2] sm:$0x3] %vm46, 0.0
      %vm48 = vcmask 1024
      %49 = vst.msk [vmem:[#allocation3] sm:$0x3] %vm48, 0.0
    $region21: #{tpu_custom_call.1} parent=1 // pred_fallthru
      _
    %v50 = vld [vmem:[#allocation4] sm:$0x3]
    %v51 = vld [vmem:[#allocation3] sm:$0x3]
    %vm52 = vcmask 58368
    %v53 = vsel %vm52, %v50, 0.0
    %54 = vadd.xlane.f32.xlu0 %v53
    %v55 = vpop.xlane.xlu0 %54
    %v56 = vadd.f32 %v51, %v55
    %vm57 = vcmask 1024
    %58 = vst.msk [vmem:[#allocation3] sm:$0x3] %vm57, %v56
    %v59 = vperm.slane %v50, 0
    %v60 = vlaneseq
    %v61 = vshrl.u32 %v60, 7
    %63 = vset.pattern.permute.xlu0 %v61
    %64 = vperm.xlu0 %63, %v59
    %v65 = vpop.permute.xlu0 %64
    %v66 = vperm.slane %v50, 1
    %v67 = vlaneseq
    %v68 = vshrl.u32 %v67, 7
    %70 = vset.pattern.permute.xlu0 %v68
    %71 = vperm.xlu0 %70, %v66
    %v72 = vpop.permute.xlu0 %71
    %v73 = vld [vmem:[#allocation7] sm:$0xff]
    %v74 = vld [vmem:[#allocation7 + $0x8] sm:$0xff]
    %v75 = vld [vmem:[#allocation2] sm:$0x3]
    %v76 = vmul.f32 %v73, %v65
    %v77 = vmul.f32 %v74, %v72
    %vm78 = vcmask 261120
    %v79 = vsel %vm78, %v76, 0.0
    %v80 = vrot.slane %v79, 4
    %v81 = vadd.f32 %v79, %v80
    %v82 = vrot.slane %v81, 2
    %v83 = vadd.f32 %v81, %v82
    %v84 = vrot.slane %v83, 1
    %v85 = vadd.f32 %v83, %v84
    %v86 = vsel %vm78, %v77, 0.0
    %v87 = vrot.slane %v86, 4
    %v88 = vadd.f32 %v86, %v87
    %v89 = vrot.slane %v88, 2
    %v90 = vadd.f32 %v88, %v89
    %v91 = vrot.slane %v90, 1
    %v92 = vadd.f32 %v90, %v91
    %vm95 = vcmask 1041409
    %v96 = vsel %vm95, %v92, %v85
    %v98 = vadd.f32 %v75, %v96
    %vm99 = vcmask 254976
    %100 = vst.msk [vmem:[#allocation2] sm:$0x3] %vm99, %v98
    // Predicated region
    $region22: #{tpu_custom_call.1} parent=1 // pred_check
      %p101 = pneg %p42
    $region23: #{tpu_custom_call.1} parent=1 // pred_check_branch
      %103 = sbr.rel (%p101) target = $region25
    $region24: #{tpu_custom_call.1} parent=1 // pred_region
      %v104 = vld [vmem:[#allocation3] sm:$0x3]
      %v105 = vrcp.pop %v104
      %v106 = vmul.f32 %v104, %v105
      %v107 = vsub.f32 1.0, %v106
      %v108 = vmul.f32 %v105, %v107
      %v109 = vadd.f32 %v105, %v108
      %vm110 = vweird.f32 %v104
      %vm111 = vweird.f32 %v105
      %vm112 = vmor %vm110, %vm111
      %v113 = vsel %vm112, %v105, %v109
      %v114 = vand.u32 2147483647, %v104
      %vm115 = vcmp.eq.f32.partialorder %v114, 8.507059e+37
      %v116 = vand.u32 %v104, 2147483648
      %v117 = vor.u32 1.1754944e-38, %v116
      %v118 = vsel %vm115, %v117, %v113
      %v119 = vld [vmem:[#allocation2] sm:$0x3]
      %121 = vset.pattern.permute.xlu0 0
      %122 = vperm.xlu0 %121, %v118
      %v123 = vpop.permute.xlu0 %122
      %v125 = vmul.f32 %v119, %v123
      %126 = vst.msk [vmem:[#allocation9] sm:$0x3] %vm99, %v125
    $region25: #{tpu_custom_call.1} parent=1 // pred_fallthru
      _
    // Predicated region
    $region26: #{tpu_custom_call.1} parent=1 // pred_check
      _
    $region27: #{tpu_custom_call.1} parent=1 // pred_check_branch
      %128 = sbr.rel (0) target = $region29
    $region28: #{tpu_custom_call.1} parent=1 // pred_region
      %130 = vsyncadd [#allocation6], 0
      %s132 = sshll.u32 [#allocation9], 4
      %s133 = int_to_ptr.vmem [resolvable:$true] %s132
      %s134 = sshll.u32 %s2, 4
      %s135 = int_to_ptr.hbm [resolvable:$true] %s134
      %137 = dma.vmem_to_hbm [thread:$0]  %s133, 32, %s135, [#allocation6]
    $region29: #{tpu_custom_call.1} parent=1 // pred_fallthru
      _
    // Predicated region
    $region30: #{tpu_custom_call.1} parent=1 // pred_check
      _
    $region31: #{tpu_custom_call.1} parent=1 // pred_check_branch
      %139 = sbr.rel (0) target = $region33
    $region32: #{tpu_custom_call.1} parent=1 // pred_region
      %141 = dma.done [#allocation6], 32
    $region33: #{tpu_custom_call.1} parent=1 // pred_fallthru
      _
    %142 = vsyncpa [#allocation5], 1
    %143 = vsyncpa [#allocation8], 1
    %144 = vsyncpa [#allocation6], 1

</llo_original>
